<compile_context>
chip_gen: v5e
topology: v5e:2x2
jax: 0.10.0
libtpu: 0.0.40
codegen_flags: <defaults>
</compile_context>

<pallas_src>
import functools

import numpy as np

import jax
import jax.numpy as jnp
from jax.experimental import pallas as pl
from jax.experimental.pallas import tpu as pltpu


# ---------------------------------------------------------------------------
# Fused decode-step kernel
# ---------------------------------------------------------------------------

def _decoder_step_kernel(n_layers, hid, cb, ids_ref, hid_in_ref, emb_ref, *refs):
    """One full decode step.

    ids_ref   : VMEM [B, 1] int32 token ids
    hid_in_ref: VMEM [n_layers, B, H]  f32
    emb_ref   : VMEM [cb, emb_dim]     bf16
    per layer : W_all [in+H, 4H] bf16, b_all [1, 4H] f32
    head      : W_head [H, cb_pad] bf16, b_head [1, cb_pad] f32
    outputs   : pred_ref [B, cb_pad] f32, hid_out_ref [n_layers, B, H] f32
    """
    H = hid
    n_w = 2 * n_layers
    layer_refs = refs[:n_w]
    w_head_ref, b_head_ref = refs[n_w], refs[n_w + 1]
    pred_ref = refs[n_w + 2]
    hid_out_ref = refs[n_w + 3]

    B = ids_ref.shape[0]

    # ---- embedding gather as a one-hot MXU matmul (one push regardless of B) --
    onehot = (jax.lax.broadcasted_iota(jnp.int32, (B, cb), 1)
              == ids_ref[...]).astype(jnp.bfloat16)                 # [B, cb]
    x = jnp.dot(onehot, emb_ref[...],
                preferred_element_type=jnp.float32)                 # [B, emb] f32
    # Dropout(embedded): identity at inference.

    # ---- GRU stack (seq_len == 1): ONE matmul per layer -----------------------
    for l in range(n_layers):
        w_all = layer_refs[2 * l]                                   # [in+H, 4H]
        b_all = layer_refs[2 * l + 1]                               # [1, 4H]
        h = hid_in_ref[l]                                           # [B, H] f32

        xh = jnp.concatenate([x, h], axis=-1).astype(jnp.bfloat16)  # [B, in+H]
        g = jnp.dot(xh, w_all[...],
                    preferred_element_type=jnp.float32) + b_all[...]  # [B, 4H]

        r = jax.nn.sigmoid(g[:, 0:H])
        z = jax.nn.sigmoid(g[:, H:2 * H])
        n = jnp.tanh(g[:, 2 * H:3 * H] + r * g[:, 3 * H:4 * H])
        h_new = (1.0 - z) * n + z * h                               # [B, H] f32

        hid_out_ref[l] = h_new          # read-h-before-write ordering preserved
        x = h_new                       # feeds next layer / head

    # ---- folded 3-layer affine head: single matmul + bias ---------------------
    y = jnp.dot(x.astype(jnp.bfloat16), w_head_ref[...],
                preferred_element_type=jnp.float32) + b_head_ref[...]
    pred_ref[...] = y


# ---------------------------------------------------------------------------
# Parameter initialization (PyTorch-layout, mimics nn.Module __init__)
# ---------------------------------------------------------------------------

def init_decoder_params(key, cb_size, emb_dim, hid_dim, n_layers):
    hid = hid_dim * 2  # self.hid_dim = hid_dim * 2 in the module
    params = {"cb_size": cb_size, "emb_dim": emb_dim, "hid": hid,
              "n_layers": n_layers}
    ks = iter(jax.random.split(key, 4 + 4 * n_layers + 6))

    def unif(k, shape, fan_in):
        bound = 1.0 / jnp.sqrt(jnp.float32(fan_in))
        return jax.random.uniform(k, shape, jnp.float32, -bound, bound)

    params["embedding"] = jax.random.normal(next(ks), (cb_size, emb_dim),
                                            jnp.float32)
    for l in range(n_layers):
        in_dim = emb_dim if l == 0 else hid
        params[f"w_ih_{l}"] = unif(next(ks), (3 * hid, in_dim), hid)
        params[f"w_hh_{l}"] = unif(next(ks), (3 * hid, hid), hid)
        params[f"b_ih_{l}"] = unif(next(ks), (3 * hid,), hid)
        params[f"b_hh_{l}"] = unif(next(ks), (3 * hid,), hid)

    params["w1"] = unif(next(ks), (hid * 2, hid), hid)
    params["b1"] = unif(next(ks), (hid * 2,), hid)
    params["w2"] = unif(next(ks), (hid * 4, hid * 2), hid * 2)
    params["b2"] = unif(next(ks), (hid * 4,), hid * 2)
    params["w3"] = unif(next(ks), (cb_size, hid * 4), hid * 4)
    params["b3"] = unif(next(ks), (cb_size,), hid * 4)
    return params


def prepare_kernel_params(params):
    """One-time host-side (float64) layout work:
      * block-stack each layer's GRU gates into one [in+H, 4H] matrix and one
        [1, 4H] bias (r/z input+hidden biases folded),
      * fold the 3 head Linear layers into a single [H, cb_pad] affine,
      * store matmul weights in bf16, biases in f32, padded lane-dense."""
    H = params["hid"]
    cb = params["cb_size"]
    emb_dim = params["emb_dim"]
    n_layers = params["n_layers"]
    cb_pad = ((cb + 127) // 128) * 128

    def f64(a):
        return np.asarray(a, dtype=np.float64)

    kp = {"n_layers": n_layers, "hid": H, "cb_size": cb, "cb_pad": cb_pad,
          "emb_dim": emb_dim,
          "embedding": jnp.asarray(np.asarray(params["embedding"]),
                                   jnp.bfloat16)}

    flat = []
    for l in range(n_layers):
        in_dim = emb_dim if l == 0 else H
        w_ih = f64(params[f"w_ih_{l}"])          # [3H, in]  rows ordered r,z,n
        w_hh = f64(params[f"w_hh_{l}"])          # [3H, H]
        b_ih = f64(params[f"b_ih_{l}"])
        b_hh = f64(params[f"b_hh_{l}"])

        w_all = np.zeros((in_dim + H, 4 * H), np.float64)
        w_all[:in_dim, 0:3 * H] = w_ih.T                 # Wih_r | Wih_z | Wih_n
        w_all[in_dim:, 0:H] = w_hh[0:H].T                # Whh_r
        w_all[in_dim:, H:2 * H] = w_hh[H:2 * H].T        # Whh_z
        w_all[in_dim:, 3 * H:4 * H] = w_hh[2 * H:3 * H].T  # Whh_n (r-gated term)

        b_all = np.zeros((1, 4 * H), np.float64)
        b_all[0, 0:H] = b_ih[0:H] + b_hh[0:H]            # folded r bias
        b_all[0, H:2 * H] = b_ih[H:2 * H] + b_hh[H:2 * H]  # folded z bias
        b_all[0, 2 * H:3 * H] = b_ih[2 * H:3 * H]        # b_in
        b_all[0, 3 * H:4 * H] = b_hh[2 * H:3 * H]        # b_hn (inside r-gate)

        flat += [jnp.asarray(w_all, jnp.bfloat16),
                 jnp.asarray(b_all, jnp.float32)]

    # Fold the bias-carrying 3-layer head into one affine (exact in f64).
    w1, b1 = f64(params["w1"]), f64(params["b1"])
    w2, b2 = f64(params["w2"]), f64(params["b2"])
    w3, b3 = f64(params["w3"]), f64(params["b3"])
    w_head = w1.T @ w2.T @ w3.T                          # [H, cb]
    b_head = (b1 @ w2.T + b2) @ w3.T + b3                # [cb]

    w_head_pad = np.zeros((H, cb_pad), np.float64)
    w_head_pad[:, :cb] = w_head
    b_head_pad = np.zeros((1, cb_pad), np.float64)
    b_head_pad[0, :cb] = b_head
    flat += [jnp.asarray(w_head_pad, jnp.bfloat16),
             jnp.asarray(b_head_pad, jnp.float32)]

    kp["flat_weights"] = tuple(flat)
    return kp


# ---------------------------------------------------------------------------
# Forward pass (matches Decoder.forward, `input.dim() == 1` branch, eval mode)
# ---------------------------------------------------------------------------

def decoder_forward(kparams, input_ids, hidden, encoder_outputs):
    """input_ids: [B] int32; hidden: [n_layers, B, hid]; encoder_outputs unused
    (kept for signature parity). Returns (prediction [B, cb_size], hidden)."""
    del encoder_outputs  # not used by the reference forward pass
    n_layers = kparams["n_layers"]
    H = kparams["hid"]
    cb, cb_pad = kparams["cb_size"], kparams["cb_pad"]
    B = int(input_ids.shape[0])
    flat = kparams["flat_weights"]

    vmem = pl.BlockSpec(memory_space=pltpu.MemorySpace.VMEM)
    kernel = functools.partial(_decoder_step_kernel, n_layers, H, cb)

    pred_pad, hidden_out = pl.pallas_call(
        kernel,
        out_shape=(jax.ShapeDtypeStruct((B, cb_pad), jnp.float32),
                   jax.ShapeDtypeStruct((n_layers, B, H), jnp.float32)),
        in_specs=[vmem, vmem, vmem] + [vmem] * len(flat),
        out_specs=(vmem, vmem),
        input_output_aliases={1: 1},   # hidden state updated in place
    )(input_ids.astype(jnp.int32).reshape(B, 1), hidden,
      kparams["embedding"], *flat)

    # Padded logit lanes [cb:cb_pad) are exactly 0.0 and dropped here.
    return pred_pad[:, :cb], hidden_out


# ---------------------------------------------------------------------------
# Pure-JAX f32 reference (PyTorch semantics) for a correctness sanity check
# ---------------------------------------------------------------------------

def decoder_forward_ref(params, input_ids, hidden):
    H = params["hid"]
    n_layers = params["n_layers"]
    x = params["embedding"][input_ids]                   # [B, emb]
    new_hidden = []
    for l in range(n_layers):
        w_ih, w_hh = params[f"w_ih_{l}"], params[f"w_hh_{l}"]
        b_ih, b_hh = params[f"b_ih_{l}"], params[f"b_hh_{l}"]
        h = hidden[l]
        gi = x @ w_ih.T + b_ih
        gh = h @ w_hh.T + b_hh
        r = jax.nn.sigmoid(gi[:, 0:H] + gh[:, 0:H])
        z = jax.nn.sigmoid(gi[:, H:2 * H] + gh[:, H:2 * H])
        n = jnp.tanh(gi[:, 2 * H:3 * H] + r * gh[:, 2 * H:3 * H])
        h_new = (1.0 - z) * n + z * h
        new_hidden.append(h_new)
        x = h_new
    y = x @ params["w1"].T + params["b1"]
    y = y @ params["w2"].T + params["b2"]
    pred = y @ params["w3"].T + params["b3"]
    return pred, jnp.stack(new_hidden)


# ---------------------------------------------------------------------------
# Main
# ---------------------------------------------------------------------------

if __name__ == "__main__":
    cb_size, emb_dim, hid_dim, n_layers, dropout = 32, 16, 16, 2, 0.0
    hid = hid_dim * 2
    batch, enc_seq = 2, 8

    key = jax.random.PRNGKey(0)
    k_params, k_ids, k_hidden, k_enc = jax.random.split(key, 4)

    torch_style_params = init_decoder_params(k_params, cb_size, emb_dim,
                                             hid_dim, n_layers)
    kparams = prepare_kernel_params(torch_style_params)

    input_ids = jax.random.randint(k_ids, (batch,), 0, cb_size, jnp.int32)
    hidden0 = jax.random.normal(k_hidden, (n_layers, batch, hid), jnp.float32)
    encoder_outputs = jax.random.normal(k_enc, (batch, enc_seq, hid),
                                        jnp.float32)

    # Reference (computed BEFORE the kernel call since `hidden` is donated).
    pred_ref, hidden_ref = decoder_forward_ref(torch_style_params, input_ids,
                                               hidden0)
    pred_ref, hidden_ref = jax.block_until_ready((pred_ref, hidden_ref))

    fwd = jax.jit(functools.partial(decoder_forward, kparams),
                  donate_argnums=(1,))
    prediction, hidden1 = fwd(input_ids, hidden0, encoder_outputs)
    jax.block_until_ready((prediction, hidden1))

    assert prediction.shape == (batch, cb_size)
    assert hidden1.shape == (n_layers, batch, hid)
    assert bool(jnp.all(jnp.isfinite(prediction)))
    assert bool(jnp.all(jnp.isfinite(hidden1)))
    # bf16 weights + folded head -> loose tolerance vs the f32 reference.
    assert float(jnp.max(jnp.abs(prediction - pred_ref))) < 1e-1
    assert float(jnp.max(jnp.abs(hidden1 - hidden_ref))) < 1e-1

    print("KERNEL_OK")
</pallas_src>

<mosaic_0001>
module attributes {stable_mosaic.version = 11 : i64} {
  func.func @_decoder_step_kernel(%arg0: memref<2x1xi32, #tpu.memory_space<vmem>>, %arg1: memref<2x2x32xf32, #tpu.memory_space<vmem>>, %arg2: memref<32x16xbf16, #tpu.memory_space<vmem>>, %arg3: memref<48x128xbf16, #tpu.memory_space<vmem>>, %arg4: memref<1x128xf32, #tpu.memory_space<vmem>>, %arg5: memref<64x128xbf16, #tpu.memory_space<vmem>>, %arg6: memref<1x128xf32, #tpu.memory_space<vmem>>, %arg7: memref<32x128xbf16, #tpu.memory_space<vmem>>, %arg8: memref<1x128xf32, #tpu.memory_space<vmem>>, %arg9: memref<2x128xf32, #tpu.memory_space<vmem>>, %arg10: memref<2x2x32xf32, #tpu.memory_space<vmem>>) attributes {dimension_semantics = [], scalar_prefetch = 0 : i64, scratch_operands = 0 : i64, tpu.core_type = #tpu.core_type<tc>} {
    %0 = tpu.iota {dimensions = array<i32: 1>} : vector<2x32xi32>
    %c0 = arith.constant 0 : index
    %c0_0 = arith.constant 0 : index
    %1 = vector.load %arg0[%c0, %c0_0] : memref<2x1xi32, #tpu.memory_space<vmem>>, vector<2x1xi32>
    %2 = vector.broadcast %1 : vector<2x1xi32> to vector<2x32xi32>
    %3 = arith.cmpi eq, %0, %2 : vector<2x32xi32>
    %4 = arith.extui %3 : vector<2x32xi1> to vector<2x32xi32>
    %5 = arith.sitofp %4 : vector<2x32xi32> to vector<2x32xf32>
    %6 = arith.truncf %5 : vector<2x32xf32> to vector<2x32xbf16>
    %c0_1 = arith.constant 0 : index
    %c0_2 = arith.constant 0 : index
    %7 = vector.load %arg2[%c0_1, %c0_2] : memref<32x16xbf16, #tpu.memory_space<vmem>>, vector<32x16xbf16>
    %cst = arith.constant dense<0.000000e+00> : vector<2x16xf32>
    %8 = tpu.matmul %6, %7, %cst {dimension_numbers = #tpu.dot_dimension_numbers<[1], [0], [0], [1], [0, 0, 1, 1], [], []>} : vector<2x32xbf16>, vector<32x16xbf16>, vector<2x16xf32> -> vector<2x16xf32>
    %c0_3 = arith.constant 0 : index
    %c0_4 = arith.constant 0 : index
    %c0_5 = arith.constant 0 : index
    %9 = vector.load %arg1[%c0_3, %c0_4, %c0_5] : memref<2x2x32xf32, #tpu.memory_space<vmem>>, vector<1x2x32xf32>
    %10 = vector.shape_cast %9 : vector<1x2x32xf32> to vector<2x32xf32>
    %11 = tpu.concatenate %8, %10 in 1 : vector<2x16xf32>, vector<2x32xf32> -> vector<2x48xf32>
    %12 = arith.truncf %11 : vector<2x48xf32> to vector<2x48xbf16>
    %c0_6 = arith.constant 0 : index
    %c0_7 = arith.constant 0 : index
    %13 = vector.load %arg3[%c0_6, %c0_7] : memref<48x128xbf16, #tpu.memory_space<vmem>>, vector<48x128xbf16>
    %cst_8 = arith.constant dense<0.000000e+00> : vector<2x128xf32>
    %14 = tpu.matmul %12, %13, %cst_8 {dimension_numbers = #tpu.dot_dimension_numbers<[1], [0], [0], [1], [0, 0, 1, 1], [], []>} : vector<2x48xbf16>, vector<48x128xbf16>, vector<2x128xf32> -> vector<2x128xf32>
    %c0_9 = arith.constant 0 : index
    %c0_10 = arith.constant 0 : index
    %15 = vector.load %arg4[%c0_9, %c0_10] : memref<1x128xf32, #tpu.memory_space<vmem>>, vector<1x128xf32>
    %16 = vector.broadcast %15 : vector<1x128xf32> to vector<2x128xf32>
    %17 = arith.addf %14, %16 : vector<2x128xf32>
    %18 = vector.extract_strided_slice %17 {offsets = [0, 0], sizes = [2, 32], strides = [1, 1]} : vector<2x128xf32> to vector<2x32xf32>
    %19 = arith.negf %18 : vector<2x32xf32>
    %20 = math.exp %19 : vector<2x32xf32>
    %cst_11 = arith.constant 1.000000e+00 : f32
    %21 = vector.broadcast %cst_11 : f32 to vector<2x32xf32>
    %22 = arith.addf %21, %20 : vector<2x32xf32>
    %23 = arith.divf %21, %22 : vector<2x32xf32>
    %24 = vector.extract_strided_slice %17 {offsets = [0, 32], sizes = [2, 32], strides = [1, 1]} : vector<2x128xf32> to vector<2x32xf32>
    %25 = arith.negf %24 : vector<2x32xf32>
    %26 = math.exp %25 : vector<2x32xf32>
    %cst_12 = arith.constant 1.000000e+00 : f32
    %27 = vector.broadcast %cst_12 : f32 to vector<2x32xf32>
    %28 = arith.addf %27, %26 : vector<2x32xf32>
    %29 = arith.divf %27, %28 : vector<2x32xf32>
    %30 = vector.extract_strided_slice %17 {offsets = [0, 64], sizes = [2, 32], strides = [1, 1]} : vector<2x128xf32> to vector<2x32xf32>
    %31 = vector.extract_strided_slice %17 {offsets = [0, 96], sizes = [2, 32], strides = [1, 1]} : vector<2x128xf32> to vector<2x32xf32>
    %32 = arith.mulf %23, %31 : vector<2x32xf32>
    %33 = arith.addf %30, %32 : vector<2x32xf32>
    %34 = math.tanh %33 : vector<2x32xf32>
    %cst_13 = arith.constant 1.000000e+00 : f32
    %35 = vector.broadcast %cst_13 : f32 to vector<2x32xf32>
    %36 = arith.subf %35, %29 : vector<2x32xf32>
    %37 = arith.mulf %36, %34 : vector<2x32xf32>
    %38 = arith.mulf %29, %10 : vector<2x32xf32>
    %39 = arith.addf %37, %38 : vector<2x32xf32>
    %c0_14 = arith.constant 0 : index
    %c0_15 = arith.constant 0 : index
    %c0_16 = arith.constant 0 : index
    %40 = vector.load %arg10[%c0_14, %c0_15, %c0_16] : memref<2x2x32xf32, #tpu.memory_space<vmem>>, vector<1x2x32xf32>
    %41 = vector.shape_cast %40 : vector<1x2x32xf32> to vector<2x32xf32>
    %42 = vector.shape_cast %39 : vector<2x32xf32> to vector<1x2x32xf32>
    tpu.vector_store %arg10[%c0_14, %c0_15, %c0_16], %42 {strides = array<i32>} : memref<2x2x32xf32, #tpu.memory_space<vmem>>, vector<1x2x32xf32>,
    %c1 = arith.constant 1 : index
    %c0_17 = arith.constant 0 : index
    %c0_18 = arith.constant 0 : index
    %43 = vector.load %arg1[%c1, %c0_17, %c0_18] : memref<2x2x32xf32, #tpu.memory_space<vmem>>, vector<1x2x32xf32>
    %44 = vector.shape_cast %43 : vector<1x2x32xf32> to vector<2x32xf32>
    %45 = tpu.concatenate %39, %44 in 1 : vector<2x32xf32>, vector<2x32xf32> -> vector<2x64xf32>
    %46 = arith.truncf %45 : vector<2x64xf32> to vector<2x64xbf16>
    %c0_19 = arith.constant 0 : index
    %c0_20 = arith.constant 0 : index
    %47 = vector.load %arg5[%c0_19, %c0_20] : memref<64x128xbf16, #tpu.memory_space<vmem>>, vector<64x128xbf16>
    %cst_21 = arith.constant dense<0.000000e+00> : vector<2x128xf32>
    %48 = tpu.matmul %46, %47, %cst_21 {dimension_numbers = #tpu.dot_dimension_numbers<[1], [0], [0], [1], [0, 0, 1, 1], [], []>} : vector<2x64xbf16>, vector<64x128xbf16>, vector<2x128xf32> -> vector<2x128xf32>
    %c0_22 = arith.constant 0 : index
    %c0_23 = arith.constant 0 : index
    %49 = vector.load %arg6[%c0_22, %c0_23] : memref<1x128xf32, #tpu.memory_space<vmem>>, vector<1x128xf32>
    %50 = vector.broadcast %49 : vector<1x128xf32> to vector<2x128xf32>
    %51 = arith.addf %48, %50 : vector<2x128xf32>
    %52 = vector.extract_strided_slice %51 {offsets = [0, 0], sizes = [2, 32], strides = [1, 1]} : vector<2x128xf32> to vector<2x32xf32>
    %53 = arith.negf %52 : vector<2x32xf32>
    %54 = math.exp %53 : vector<2x32xf32>
    %cst_24 = arith.constant 1.000000e+00 : f32
    %55 = vector.broadcast %cst_24 : f32 to vector<2x32xf32>
    %56 = arith.addf %55, %54 : vector<2x32xf32>
    %57 = arith.divf %55, %56 : vector<2x32xf32>
    %58 = vector.extract_strided_slice %51 {offsets = [0, 32], sizes = [2, 32], strides = [1, 1]} : vector<2x128xf32> to vector<2x32xf32>
    %59 = arith.negf %58 : vector<2x32xf32>
    %60 = math.exp %59 : vector<2x32xf32>
    %cst_25 = arith.constant 1.000000e+00 : f32
    %61 = vector.broadcast %cst_25 : f32 to vector<2x32xf32>
    %62 = arith.addf %61, %60 : vector<2x32xf32>
    %63 = arith.divf %61, %62 : vector<2x32xf32>
    %64 = vector.extract_strided_slice %51 {offsets = [0, 64], sizes = [2, 32], strides = [1, 1]} : vector<2x128xf32> to vector<2x32xf32>
    %65 = vector.extract_strided_slice %51 {offsets = [0, 96], sizes = [2, 32], strides = [1, 1]} : vector<2x128xf32> to vector<2x32xf32>
    %66 = arith.mulf %57, %65 : vector<2x32xf32>
    %67 = arith.addf %64, %66 : vector<2x32xf32>
    %68 = math.tanh %67 : vector<2x32xf32>
    %cst_26 = arith.constant 1.000000e+00 : f32
    %69 = vector.broadcast %cst_26 : f32 to vector<2x32xf32>
    %70 = arith.subf %69, %63 : vector<2x32xf32>
    %71 = arith.mulf %70, %68 : vector<2x32xf32>
    %72 = arith.mulf %63, %44 : vector<2x32xf32>
    %73 = arith.addf %71, %72 : vector<2x32xf32>
    %c1_27 = arith.constant 1 : index
    %c0_28 = arith.constant 0 : index
    %c0_29 = arith.constant 0 : index
    %74 = vector.load %arg10[%c1_27, %c0_28, %c0_29] : memref<2x2x32xf32, #tpu.memory_space<vmem>>, vector<1x2x32xf32>
    %75 = vector.shape_cast %74 : vector<1x2x32xf32> to vector<2x32xf32>
    %76 = vector.shape_cast %73 : vector<2x32xf32> to vector<1x2x32xf32>
    tpu.vector_store %arg10[%c1_27, %c0_28, %c0_29], %76 {strides = array<i32>} : memref<2x2x32xf32, #tpu.memory_space<vmem>>, vector<1x2x32xf32>,
    %77 = arith.truncf %73 : vector<2x32xf32> to vector<2x32xbf16>
    %c0_30 = arith.constant 0 : index
    %c0_31 = arith.constant 0 : index
    %78 = vector.load %arg7[%c0_30, %c0_31] : memref<32x128xbf16, #tpu.memory_space<vmem>>, vector<32x128xbf16>
    %cst_32 = arith.constant dense<0.000000e+00> : vector<2x128xf32>
    %79 = tpu.matmul %77, %78, %cst_32 {dimension_numbers = #tpu.dot_dimension_numbers<[1], [0], [0], [1], [0, 0, 1, 1], [], []>} : vector<2x32xbf16>, vector<32x128xbf16>, vector<2x128xf32> -> vector<2x128xf32>
    %c0_33 = arith.constant 0 : index
    %c0_34 = arith.constant 0 : index
    %80 = vector.load %arg8[%c0_33, %c0_34] : memref<1x128xf32, #tpu.memory_space<vmem>>, vector<1x128xf32>
    %81 = vector.broadcast %80 : vector<1x128xf32> to vector<2x128xf32>
    %82 = arith.addf %79, %81 : vector<2x128xf32>
    %c0_35 = arith.constant 0 : index
    %c0_36 = arith.constant 0 : index
    %83 = vector.load %arg9[%c0_35, %c0_36] : memref<2x128xf32, #tpu.memory_space<vmem>>, vector<2x128xf32>
    tpu.vector_store %arg9[%c0_35, %c0_36], %82 {strides = array<i32>} : memref<2x128xf32, #tpu.memory_space<vmem>>, vector<2x128xf32>,
    return
  }
}

</mosaic_0001>

<llo_original>
// kernel: decoder_forward.1
$region0: #{decoder_forward.1}
  #allocation0 [shape = 'u32[]', space=smem, size = 0x4, offset = 0x4, fixed_abs, tag = 'smem constant byte address 0x4 - core index']
  #allocation1 [shape = 'u32[72,128]{1,0:T(1,128)}', space=vmem, size = 0x9000, scoped, tag = 'internal scratch']
  %s0 = inlined_call_operand.vmem [shape: s32[2,1], index: 0, kind: input, shape index: {}]
  %s1 = inlined_call_operand.vmem [shape: f32[2,2,32], index: 1, kind: input, shape index: {}, may-alias: {1,10}]
  %s2 = inlined_call_operand.hbm [shape: bf16[32,16], index: 2, kind: input, shape index: {}]
  %s3 = inlined_call_operand.hbm [shape: bf16[48,128], index: 3, kind: input, shape index: {}]
  %s4 = inlined_call_operand.vmem [shape: f32[1,128], index: 4, kind: input, shape index: {}]
  %s5 = inlined_call_operand.hbm [shape: bf16[64,128], index: 5, kind: input, shape index: {}]
  %s6 = inlined_call_operand.vmem [shape: f32[1,128], index: 6, kind: input, shape index: {}]
  %s7 = inlined_call_operand.hbm [shape: bf16[32,128], index: 7, kind: input, shape index: {}]
  %s8 = inlined_call_operand.vmem [shape: f32[1,128], index: 8, kind: input, shape index: {}]
  %s9 = inlined_call_operand.hbm [shape: f32[2,128], index: 9, kind: output, shape index: {0}]
  %s10 = inlined_call_operand.vmem [shape: f32[2,2,32], index: 10, kind: output, shape index: {1}, may-alias: {1,10}]
  %11 = xla_tuple %s9, %s10
  %s12 = sld [smem:[#allocation0]]
  $region70: #{decoder_forward.1} parent=0
    _
  %s14 = ssub.s32 1, %s12
  %s15 = scalar_select 0, %s14, %s12
  $region1: #{decoder_forward.1} parent=0
    #allocation2 [shape = 'u8[8192]{0}', space=vmem, size = 0x2000, scoped, tag = 'input window, operand 2, single buffered']
    #allocation3 [shape = 's32[1]{0}', space=sflag, size = 0x4, scoped, tag = 'scoped memory for decoder_forward.1']
    #allocation4 [shape = 's32[1]{0}', space=sflag, size = 0x4, scoped, tag = 'scoped memory for decoder_forward.1']
    #allocation5 [shape = 'u8[12288]{0}', space=vmem, size = 0x3000, scoped, tag = 'input window, operand 3, single buffered']
    #allocation6 [shape = 's32[1]{0}', space=sflag, size = 0x4, scoped, tag = 'scoped memory for decoder_forward.1']
    #allocation7 [shape = 'u8[16384]{0}', space=vmem, size = 0x4000, scoped, tag = 'input window, operand 5, single buffered']
    #allocation8 [shape = 'u8[8192]{0}', space=vmem, size = 0x2000, scoped, tag = 'input window, operand 7, single buffered']
    #allocation9 [shape = 's32[1]{0}', space=sflag, size = 0x4, scoped, tag = 'scoped memory for decoder_forward.1']
    #allocation10 [shape = 'u8[1024]{0}', space=vmem, size = 0x400, scoped, tag = 'output window, operand 0, single buffered']
    %16 = vsyncpa [#allocation3], 0
    %17 = vsyncpa [#allocation6], 0
    %18 = vsyncpa [#allocation9], 0
    %19 = vsyncpa [#allocation4], 0
    // Predicated region
    $region2: #{decoder_forward.1} parent=1 // pred_check
      _
    $region3: #{decoder_forward.1} parent=1 // pred_check_branch
      %21 = sbr.rel (0) target = $region5
    $region4: #{decoder_forward.1} parent=1 // pred_region
      _
    $region5: #{decoder_forward.1} parent=1 // pred_fallthru
      _
    // Predicated region
    $region6: #{decoder_forward.1} parent=1 // pred_check
      _
    $region7: #{decoder_forward.1} parent=1 // pred_check_branch
      %23 = sbr.rel (0) target = $region9
    $region8: #{decoder_forward.1} parent=1 // pred_region
      _
    $region9: #{decoder_forward.1} parent=1 // pred_fallthru
      _
    // Predicated region
    $region10: #{decoder_forward.1} parent=1 // pred_check
      _
    $region11: #{decoder_forward.1} parent=1 // pred_check_branch
      %25 = sbr.rel (0) target = $region13
    $region12: #{decoder_forward.1} parent=1 // pred_region
      %27 = vsyncadd [#allocation3], 0
      %s28 = sshll.u32 %s2, 4
      %s29 = int_to_ptr.hbm [resolvable:$true] %s28
      %s30 = sshll.u32 [#allocation2], 4
      %s31 = int_to_ptr.vmem [resolvable:$true] %s30
      %36 = dma.hbm_to_vmem [thread:$0]  %s29, 256, %s31, [#allocation3], 64, 64, 4
    $region13: #{decoder_forward.1} parent=1 // pred_fallthru
      _
    // Predicated region
    $region14: #{decoder_forward.1} parent=1 // pred_check
      _
    $region15: #{decoder_forward.1} parent=1 // pred_check_branch
      %38 = sbr.rel (0) target = $region17
    $region16: #{decoder_forward.1} parent=1 // pred_region
      %40 = vsyncadd [#allocation6], 0
      %s41 = sshll.u32 %s3, 4
      %s42 = int_to_ptr.hbm [resolvable:$true] %s41
      %s43 = sshll.u32 [#allocation5], 4
      %s44 = int_to_ptr.vmem [resolvable:$true] %s43
      %49 = dma.hbm_to_vmem [thread:$0]  %s42, 384, %s44, [#allocation6], 64, 64, 4
    $region17: #{decoder_forward.1} parent=1 // pred_fallthru
      _
    // Predicated region
    $region18: #{decoder_forward.1} parent=1 // pred_check
      _
    $region19: #{decoder_forward.1} parent=1 // pred_check_branch
      %51 = sbr.rel (0) target = $region21
    $region20: #{decoder_forward.1} parent=1 // pred_region
      _
    $region21: #{decoder_forward.1} parent=1 // pred_fallthru
      _
    // Predicated region
    $region22: #{decoder_forward.1} parent=1 // pred_check
      _
    $region23: #{decoder_forward.1} parent=1 // pred_check_branch
      %53 = sbr.rel (0) target = $region25
    $region24: #{decoder_forward.1} parent=1 // pred_region
      %55 = vsyncadd [#allocation6], 0
      %s56 = sshll.u32 %s5, 4
      %s57 = int_to_ptr.hbm [resolvable:$true] %s56
      %s58 = sshll.u32 [#allocation7], 4
      %s59 = int_to_ptr.vmem [resolvable:$true] %s58
      %64 = dma.hbm_to_vmem [thread:$0]  %s57, 512, %s59, [#allocation6], 64, 64, 4
    $region25: #{decoder_forward.1} parent=1 // pred_fallthru
      _
    // Predicated region
    $region26: #{decoder_forward.1} parent=1 // pred_check
      _
    $region27: #{decoder_forward.1} parent=1 // pred_check_branch
      %66 = sbr.rel (0) target = $region29
    $region28: #{decoder_forward.1} parent=1 // pred_region
      _
    $region29: #{decoder_forward.1} parent=1 // pred_fallthru
      _
    // Predicated region
    $region30: #{decoder_forward.1} parent=1 // pred_check
      _
    $region31: #{decoder_forward.1} parent=1 // pred_check_branch
      %68 = sbr.rel (0) target = $region33
    $region32: #{decoder_forward.1} parent=1 // pred_region
      %70 = vsyncadd [#allocation9], 0
      %s71 = sshll.u32 %s7, 4
      %s72 = int_to_ptr.hbm [resolvable:$true] %s71
      %s73 = sshll.u32 [#allocation8], 4
      %s74 = int_to_ptr.vmem [resolvable:$true] %s73
      %79 = dma.hbm_to_vmem [thread:$0]  %s72, 256, %s74, [#allocation9], 64, 64, 4
    $region33: #{decoder_forward.1} parent=1 // pred_fallthru
      _
    // Predicated region
    $region34: #{decoder_forward.1} parent=1 // pred_check
      _
    $region35: #{decoder_forward.1} parent=1 // pred_check_branch
      %81 = sbr.rel (0) target = $region37
    $region36: #{decoder_forward.1} parent=1 // pred_region
      _
    $region37: #{decoder_forward.1} parent=1 // pred_fallthru
      _
    // Predicated region
    $region38: #{decoder_forward.1} parent=1 // pred_check
      _
    $region39: #{decoder_forward.1} parent=1 // pred_check_branch
      %83 = sbr.rel (0) target = $region41
    $region40: #{decoder_forward.1} parent=1 // pred_region
      %85 = dma.done [#allocation3], 256
    $region41: #{decoder_forward.1} parent=1 // pred_fallthru
      _
    // Predicated region
    $region42: #{decoder_forward.1} parent=1 // pred_check
      _
    $region43: #{decoder_forward.1} parent=1 // pred_check_branch
      %87 = sbr.rel (0) target = $region45
    $region44: #{decoder_forward.1} parent=1 // pred_region
      %89 = dma.done [#allocation6], 384
    $region45: #{decoder_forward.1} parent=1 // pred_fallthru
      _
    // Predicated region
    $region46: #{decoder_forward.1} parent=1 // pred_check
      _
    $region47: #{decoder_forward.1} parent=1 // pred_check_branch
      %91 = sbr.rel (0) target = $region49
    $region48: #{decoder_forward.1} parent=1 // pred_region
      %93 = dma.done [#allocation6], 512
    $region49: #{decoder_forward.1} parent=1 // pred_fallthru
      _
    // Predicated region
    $region50: #{decoder_forward.1} parent=1 // pred_check
      _
    $region51: #{decoder_forward.1} parent=1 // pred_check_branch
      %95 = sbr.rel (0) target = $region53
    $region52: #{decoder_forward.1} parent=1 // pred_region
      %97 = dma.done [#allocation9], 256
    $region53: #{decoder_forward.1} parent=1 // pred_fallthru
      _
    %v99 = vlaneseq
    %v100 = vand.u32 %v99, 127
    %v101 = vld [vmem:[%s0] sm:$0x3]
    %102 = vset.pattern.permute.xlu0 0
    %103 = vperm.xlu0 %102, %v101
    %v104 = vpop.permute.xlu0 %103
    %vm105 = vcmp.eq.s32.totalorder %v100, %v104
    %v106 = vsel %vm105, 1, 0
    %v107 = vcvt.s32.f32 %v106
    %v108 = vpack.c.bf16 %v107, %v107
    %v109 = vld [vmem:[#allocation2] sm:$0xf]
    %v110 = vld [vmem:[#allocation2 + $0x4] sm:$0xf]
    %v111 = vld [vmem:[#allocation2 + $0x8] sm:$0xf]
    %v112 = vld [vmem:[#allocation2 + $0xc] sm:$0xf]
    %v117 = vunpack.c.l.b16 %v109
    %v118 = vunpack.c.l.b16 %v110
    %v119 = vunpack.c.l.b16 %v111
    %v120 = vunpack.c.l.b16 %v112
    %v121 = vpack.c.b16 %v118, %v117
    %v122 = vpack.c.b16 %v120, %v119
    %vm125 = vcmask 261120
    %v127 = vsel %vm125, %v108, 0
    %129 = vmatpush.bf16.msra.mxu0 0
    %130 = vmatpush.bf16.msra.mxu0 0
    %131 = vmatpush.bf16.msra.mxu0 0
    %132 = vmatpush.bf16.msra.mxu0 0
    %133 = vmatpush.bf16.msra.mxu0 0
    %134 = vmatpush.bf16.msra.mxu0 0
    %135 = vmatpush.bf16.msra.mxu0 %v122
    %136 = vmatpush.bf16.msra.mxu0 %v121
    %137 = vmatmul.bf16.gmra.mxu0 %v127
    %v138 = vpop.f32.mrf.mxu0
    %v139 = vadd.f32 0.0, %v138
    %v140 = vpop.f32.mrf.mxu0
    %141 = vdwg.mxu0
    %v142 = vld [vmem:[%s1] sm:$0x3]
    %144 = vrot.lane.b32.xlu0 %v142, 16
    %v145 = vpop.permute.xlu0 %144
    %vm147 = vcmask 130048
    %v148 = vsel %vm147, %v139, %v145
    %v149 = vpack.c.bf16 %v148, %v148
    %v150 = vld [vmem:[#allocation5] sm:$0xf]
    %v151 = vld [vmem:[#allocation5 + $0x4] sm:$0xf]
    %v152 = vld [vmem:[#allocation5 + $0x8] sm:$0xf]
    %v153 = vld [vmem:[#allocation5 + $0xc] sm:$0xf]
    %v154 = vld [vmem:[#allocation5 + $0x10] sm:$0xf]
    %v155 = vld [vmem:[#allocation5 + $0x14] sm:$0xf]
    %v156 = vld [vmem:[%s4] sm:$0x1]
    %v158 = vperm.slane %v156, 0
    %v166 = vunpack.c.l.b16 %v150
    %v167 = vunpack.c.l.b16 %v151
    %v168 = vunpack.c.l.b16 %v152
    %v169 = vunpack.c.l.b16 %v153
    %v170 = vunpack.c.l.b16 %v154
    %v171 = vunpack.c.l.b16 %v155
    %v172 = vpack.c.b16 %v167, %v166
    %v173 = vpack.c.b16 %v169, %v168
    %v174 = vpack.c.b16 %v171, %v170
    %vm178 = vcmask 392192
    %v180 = vsel %vm178, %v149, 0
    %182 = vmatpush.bf16.msra.mxu0 0
    %183 = vmatpush.bf16.msra.mxu0 0
    %184 = vmatpush.bf16.msra.mxu0 0
    %185 = vmatpush.bf16.msra.mxu0 0
    %186 = vmatpush.bf16.msra.mxu0 0
    %187 = vmatpush.bf16.msra.mxu0 %v174
    %188 = vmatpush.bf16.msra.mxu0 %v173
    %189 = vmatpush.bf16.msra.mxu0 %v172
    %190 = vmatmul.bf16.gmra.mxu0 %v180
    %v191 = vpop.f32.mrf.mxu0
    %v192 = vadd.f32 %v158, %v191
    %v193 = vpop.f32.mrf.mxu0
    %194 = vdwg.mxu0
    %v195 = vxor.u32 %v192, 2147483648
    %v196 = vmul.f32 %v195, 1.442695
    %v197 = vpow.pop %v196
    %v198 = vadd.f32 %v197, 1.0
    %v199 = vrcp.pop %v198
    %v200 = vmul.f32 %v198, %v199
    %v201 = vsub.f32 1.0, %v200
    %v202 = vmul.f32 %v199, %v201
    %v203 = vadd.f32 %v199, %v202
    %vm204 = vweird.f32 %v198
    %vm205 = vweird.f32 %v199
    %vm206 = vmor %vm204, %vm205
    %v207 = vsel %vm206, %v199, %v203
    %v208 = vand.u32 2147483647, %v198
    %vm209 = vcmp.eq.f32.partialorder %v208, 8.507059e+37
    %v210 = vand.u32 %v198, 2147483648
    %v211 = vor.u32 1.1754944e-38, %v210
    %v212 = vsel %vm209, %v211, %v207
    %v213 = vmul.f32 1.0, %v212
    %215 = vrot.lane.b32.xlu0 %v192, 32
    %v216 = vpop.permute.xlu0 %215
    %v218 = vmul.f32 %v213, %v216
    %220 = vrot.lane.b32.xlu0 %v218, 64
    %v221 = vpop.permute.xlu0 %220
    %v223 = vadd.f32 %v192, %v221
    %v224 = vtanh.pop %v223
    %v225 = vsub.f32 1.0, %v213
    %227 = vrot.lane.b32.xlu0 %v224, 96
    %v228 = vpop.permute.xlu0 %227
    %v230 = vmul.f32 %v225, %v228
    %231 = vrot.lane.b32.xlu0 %v142, 32
    %v232 = vpop.permute.xlu0 %231
    %v234 = vmul.f32 %v213, %v232
    %v235 = vadd.f32 %v230, %v234
    %237 = vrot.lane.b32.xlu0 %v235, 96
    %v238 = vpop.permute.xlu0 %237
    %vm240 = vcmask 254976
    %241 = vst.msk [vmem:[%s10] sm:$0x3] %vm240, %v238
    %s242 = scalar_lea.vmem %s1, 2
    %v243 = vld [vmem:[%s242] sm:$0x3]
    %245 = vrot.lane.b32.xlu0 %v243, 32
    %v246 = vpop.permute.xlu0 %245
    %v248 = vsel %vm125, %v238, %v246
    %v249 = vpack.c.bf16 %v248, %v248
    %v250 = vld [vmem:[#allocation7] sm:$0xf]
    %v251 = vld [vmem:[#allocation7 + $0x4] sm:$0xf]
    %v252 = vld [vmem:[#allocation7 + $0x8] sm:$0xf]
    %v253 = vld [vmem:[#allocation7 + $0xc] sm:$0xf]
    %v254 = vld [vmem:[#allocation7 + $0x10] sm:$0xf]
    %v255 = vld [vmem:[#allocation7 + $0x14] sm:$0xf]
    %v256 = vld [vmem:[#allocation7 + $0x18] sm:$0xf]
    %v257 = vld [vmem:[#allocation7 + $0x1c] sm:$0xf]
    %v258 = vld [vmem:[%s6] sm:$0x1]
    %v260 = vperm.slane %v258, 0
    %v270 = vunpack.c.l.b16 %v250
    %v271 = vunpack.c.l.b16 %v251
    %v272 = vunpack.c.l.b16 %v252
    %v273 = vunpack.c.l.b16 %v253
    %v274 = vunpack.c.l.b16 %v254
    %v275 = vunpack.c.l.b16 %v255
    %v276 = vunpack.c.l.b16 %v256
    %v277 = vunpack.c.l.b16 %v257
    %v278 = vpack.c.b16 %v271, %v270
    %v279 = vpack.c.b16 %v273, %v272
    %v280 = vpack.c.b16 %v275, %v274
    %v281 = vpack.c.b16 %v277, %v276
    %vm286 = vcmask 523264
    %v288 = vsel %vm286, %v249, 0
    %290 = vmatpush.bf16.msra.mxu0 0
    %291 = vmatpush.bf16.msra.mxu0 0
    %292 = vmatpush.bf16.msra.mxu0 0
    %293 = vmatpush.bf16.msra.mxu0 0
    %294 = vmatpush.bf16.msra.mxu0 %v281
    %295 = vmatpush.bf16.msra.mxu0 %v280
    %296 = vmatpush.bf16.msra.mxu0 %v279
    %297 = vmatpush.bf16.msra.mxu0 %v278
    %298 = vmatmul.bf16.gmra.mxu0 %v288
    %v299 = vpop.f32.mrf.mxu0
    %v300 = vadd.f32 %v260, %v299
    %v301 = vpop.f32.mrf.mxu0
    %302 = vdwg.mxu0
    %v303 = vxor.u32 %v300, 2147483648
    %v304 = vmul.f32 %v303, 1.442695
    %v305 = vpow.pop %v304
    %v306 = vadd.f32 %v305, 1.0
    %v307 = vrcp.pop %v306
    %v308 = vmul.f32 %v306, %v307
    %v309 = vsub.f32 1.0, %v308
    %v310 = vmul.f32 %v307, %v309
    %v311 = vadd.f32 %v307, %v310
    %vm312 = vweird.f32 %v306
    %vm313 = vweird.f32 %v307
    %vm314 = vmor %vm312, %vm313
    %v315 = vsel %vm314, %v307, %v311
    %v316 = vand.u32 2147483647, %v306
    %vm317 = vcmp.eq.f32.partialorder %v316, 8.507059e+37
    %v318 = vand.u32 %v306, 2147483648
    %v319 = vor.u32 1.1754944e-38, %v318
    %v320 = vsel %vm317, %v319, %v315
    %v321 = vmul.f32 1.0, %v320
    %323 = vrot.lane.b32.xlu0 %v300, 32
    %v324 = vpop.permute.xlu0 %323
    %v326 = vmul.f32 %v321, %v324
    %328 = vrot.lane.b32.xlu0 %v326, 64
    %v329 = vpop.permute.xlu0 %328
    %v331 = vadd.f32 %v300, %v329
    %v332 = vtanh.pop %v331
    %v333 = vsub.f32 1.0, %v321
    %335 = vrot.lane.b32.xlu0 %v332, 96
    %v336 = vpop.permute.xlu0 %335
    %v338 = vmul.f32 %v333, %v336
    %v339 = vmul.f32 %v321, %v246
    %v340 = vadd.f32 %v338, %v339
    %342 = vrot.lane.b32.xlu0 %v340, 96
    %v343 = vpop.permute.xlu0 %342
    %s345 = scalar_lea.vmem %s10, 2
    %346 = vst.msk [vmem:[%s345] sm:$0x3] %vm240, %v343
    %v347 = vpack.c.bf16 %v340, %v340
    %v348 = vld [vmem:[#allocation8] sm:$0xf]
    %v349 = vld [vmem:[#allocation8 + $0x4] sm:$0xf]
    %v350 = vld [vmem:[#allocation8 + $0x8] sm:$0xf]
    %v351 = vld [vmem:[#allocation8 + $0xc] sm:$0xf]
    %v352 = vld [vmem:[%s8] sm:$0x1]
    %v354 = vperm.slane %v352, 0
    %357 = vrot.lane.b32.xlu0 %v347, 96
    %v358 = vpop.permute.xlu0 %357
    %v363 = vunpack.c.l.b16 %v348
    %v364 = vunpack.c.l.b16 %v349
    %v365 = vunpack.c.l.b16 %v350
    %v366 = vunpack.c.l.b16 %v351
    %v367 = vpack.c.b16 %v364, %v363
    %v368 = vpack.c.b16 %v366, %v365
    %v372 = vsel %vm125, %v358, 0
    %374 = vmatpush.bf16.msra.mxu0 0
    %375 = vmatpush.bf16.msra.mxu0 0
    %376 = vmatpush.bf16.msra.mxu0 0
    %377 = vmatpush.bf16.msra.mxu0 0
    %378 = vmatpush.bf16.msra.mxu0 0
    %379 = vmatpush.bf16.msra.mxu0 0
    %380 = vmatpush.bf16.msra.mxu0 %v368
    %381 = vmatpush.bf16.msra.mxu0 %v367
    %382 = vmatmul.bf16.gmra.mxu0 %v372
    %v383 = vpop.f32.mrf.mxu0
    %v384 = vadd.f32 %v354, %v383
    %v385 = vpop.f32.mrf.mxu0
    %386 = vdwg.mxu0
    %387 = vst [vmem:[#allocation10] sm:$0x3] %v384
    // Predicated region
    $region54: #{decoder_forward.1} parent=1 // pred_check
      _
    $region55: #{decoder_forward.1} parent=1 // pred_check_branch
      %389 = sbr.rel (0) target = $region57
    $region56: #{decoder_forward.1} parent=1 // pred_region
      %391 = vsyncadd [#allocation4], 0
      %s393 = sshll.u32 [#allocation10], 4
      %s394 = int_to_ptr.vmem [resolvable:$true] %s393
      %s395 = sshll.u32 %s9, 4
      %s396 = int_to_ptr.hbm [resolvable:$true] %s395
      %398 = dma.vmem_to_hbm [thread:$0]  %s394, 32, %s396, [#allocation4]
    $region57: #{decoder_forward.1} parent=1 // pred_fallthru
      _
    // Predicated region
    $region58: #{decoder_forward.1} parent=1 // pred_check
      _
    $region59: #{decoder_forward.1} parent=1 // pred_check_branch
      %400 = sbr.rel (0) target = $region61
    $region60: #{decoder_forward.1} parent=1 // pred_region
      _
    $region61: #{decoder_forward.1} parent=1 // pred_fallthru
      _
    // Predicated region
    $region62: #{decoder_forward.1} parent=1 // pred_check
      _
    $region63: #{decoder_forward.1} parent=1 // pred_check_branch
      %402 = sbr.rel (0) target = $region65
    $region64: #{decoder_forward.1} parent=1 // pred_region
      %404 = dma.done [#allocation4], 32
    $region65: #{decoder_forward.1} parent=1 // pred_fallthru
      _
    // Predicated region
    $region66: #{decoder_forward.1} parent=1 // pred_check
      _
    $region67: #{decoder_forward.1} parent=1 // pred_check_branch
      %406 = sbr.rel (0) target = $region69
    $region68: #{decoder_forward.1} parent=1 // pred_region
      _
    $region69: #{decoder_forward.1} parent=1 // pred_fallthru
      _
    %407 = vsyncpa [#allocation3], 1
    %408 = vsyncpa [#allocation6], 1
    %409 = vsyncpa [#allocation9], 1
    %410 = vsyncpa [#allocation4], 1

</llo_original>
